<compile_context>
chip_gen: v7x
topology: tpu7x:2x2x1
jax: 0.10.0
libtpu: 0.0.40
codegen_flags: <defaults>
</compile_context>

<pallas_src>
import math

import jax
import jax.numpy as jnp
from jax import lax
from jax.experimental import pallas as pl
from jax.experimental.pallas import tpu as pltpu

# ----- configuration (small, consistent with the module) -----
BATCH = 2
SEQ = 8
HIDDEN = 32
NUM_HEADS = 4
HEAD_SIZE = HIDDEN // NUM_HEADS        # 8
STACK = NUM_HEADS * SEQ                # 32: rows of the head-stacked per-batch problem
OUT_PAD = 128                          # lane-dense output width (sliced back to HIDDEN)
NEG_INF = -1.0e9                       # additive mask for cross-head blocks


def bert_self_attention_kernel(x_ref, wqkv_ref, bqkv_ref, mask_ref, o_ref):
    # One grid step == one batch element.
    # x_ref:    (SEQ, HIDDEN)       this batch's rows
    # wqkv_ref: (HIDDEN, 3*HIDDEN)  fused [Wq*scale | Wk | Wv] (scale folded at init)
    # bqkv_ref: (1, 3*HIDDEN)       fused [bq*scale | bk | bv]
    # mask_ref: (STACK, STACK)      block-diagonal additive mask for the stacked scores
    # o_ref:    (SEQ, OUT_PAD)      context; lanes [0, HIDDEN) valid, rest zero
    x = x_ref[...]

    # Single fused QKV projection: one MXU push.
    qkv = jnp.dot(x, wqkv_ref[...],
                  preferred_element_type=jnp.float32) + bqkv_ref[...]      # (SEQ, 3H)

    # Stack heads along the sublane/row axis so per-head data is a leading-dim block.
    # (Static unroll is fine at NUM_HEADS=4; switch to fori_loop at 12+ heads.)
    def stack_heads(base):
        return jnp.concatenate(
            [qkv[:, base + h * HEAD_SIZE: base + (h + 1) * HEAD_SIZE]
             for h in range(NUM_HEADS)], axis=0)                            # (STACK, d)

    q_stk = stack_heads(0)
    k_stk = stack_heads(HIDDEN)
    v_stk = stack_heads(2 * HIDDEN)

    # All heads' scores in ONE matmul (contract head dim of both -> no k transpose).
    # Off-diagonal (cross-head) blocks are real dot products but are pushed to -1e9
    # by mask_ref, so they contribute exactly zero after softmax.
    scores = lax.dot_general(q_stk, k_stk, (((1,), (1,)), ((), ())),
                             preferred_element_type=jnp.float32)            # (STACK, STACK)
    scores = scores + mask_ref[...]

    # Numerically stable, EXACT softmax (approx reciprocal dropped per review).
    scores = scores - jnp.max(scores, axis=-1, keepdims=True)
    probs = jnp.exp(scores)
    probs = probs / jnp.sum(probs, axis=-1, keepdims=True)

    # All heads' context in ONE matmul.
    ctx_stk = jnp.dot(probs, v_stk, preferred_element_type=jnp.float32)     # (STACK, d)

    # Re-interleave heads back onto lanes with a single assembly, pad to a full
    # 128-lane slab and write with one unmasked, lane-dense store.
    ctx = jnp.concatenate(
        [ctx_stk[h * SEQ:(h + 1) * SEQ, :] for h in range(NUM_HEADS)], axis=1)  # (SEQ, H)
    pad = jnp.zeros((SEQ, OUT_PAD - HIDDEN), jnp.float32)
    o_ref[...] = jnp.concatenate([ctx, pad], axis=1).astype(o_ref.dtype)


def fuse_qkv_params(wq, wk, wv, bq, bk, bv):
    """ONE-TIME parameter fusion (call at init, not per forward): concat Q/K/V and
    fold 1/sqrt(head_size) into the Q columns so the kernel never multiplies by it."""
    scale = 1.0 / math.sqrt(HEAD_SIZE)
    wqkv = jnp.concatenate([wq * scale, wk, wv], axis=1)    # (H, 3H)
    bqkv = jnp.concatenate([bq * scale, bk, bv], axis=1)    # (1, 3H)
    return wqkv, bqkv


def expand_attention_mask(attention_mask):
    """(B,1,S,S) additive mask -> per-batch block-diagonal (STACK, STACK) mask for the
    head-stacked scores, flattened to (B*STACK, STACK). Per-call (runtime data) but tiny:
    diagonal blocks repeat the batch mask per head; cross-head blocks are -1e9."""
    m3 = attention_mask[:, 0]                                        # (B, S, S)
    tiled = jnp.tile(m3, (1, NUM_HEADS, NUM_HEADS))                  # (B, STACK, STACK)
    idx = jnp.arange(STACK)
    same_head = (idx[:, None] // SEQ) == (idx[None, :] // SEQ)       # (STACK, STACK)
    big = jnp.where(same_head[None, :, :], tiled, jnp.float32(NEG_INF))
    return big.reshape(BATCH * STACK, STACK)


def bert_self_attention(hidden_states, wqkv, bqkv, attention_mask):
    B, S, H = hidden_states.shape
    x2d = hidden_states.reshape(B * S, H)                   # fold batch into rows
    mask2d = expand_attention_mask(attention_mask)          # (B*STACK, STACK)

    out_padded = pl.pallas_call(
        bert_self_attention_kernel,
        out_shape=jax.ShapeDtypeStruct((B * S, OUT_PAD), hidden_states.dtype),
        grid_spec=pltpu.PrefetchScalarGridSpec(
            num_scalar_prefetch=0,
            grid=(B,),                                       # parallel batch axis (v7x: 2 TCs)
            in_specs=[
                pl.BlockSpec((S, H), lambda i: (i, 0)),              # x rows of batch i
                pl.BlockSpec((H, 3 * H), lambda i: (0, 0)),          # fused weights (resident)
                pl.BlockSpec((1, 3 * H), lambda i: (0, 0)),          # fused bias (resident)
                pl.BlockSpec((STACK, STACK), lambda i: (i, 0)),      # per-batch block-diag mask
            ],
            out_specs=pl.BlockSpec((S, OUT_PAD), lambda i: (i, 0)),  # lane-dense (128) block
        ),
        compiler_params=pltpu.CompilerParams(
            dimension_semantics=("parallel",)),
    )(x2d, wqkv, bqkv, mask2d)

    return out_padded[:, :H].reshape(B, S, H)


def reference_attention(x, wq, wk, wv, bq, bk, bv, mask):
    """Pure-JAX reference matching the PyTorch forward semantics."""
    B, S, H = x.shape
    q = x @ wq + bq[0]
    k = x @ wk + bk[0]
    v = x @ wv + bv[0]

    def split(t):  # (B,S,H) -> (B,nh,S,d)
        return t.reshape(B, S, NUM_HEADS, HEAD_SIZE).transpose(0, 2, 1, 3)

    qh, kh, vh = split(q), split(k), split(v)
    scores = jnp.einsum("bhqd,bhkd->bhqk", qh, kh) / math.sqrt(HEAD_SIZE)
    scores = scores + mask                                   # (B,1,S,S) broadcast
    probs = jax.nn.softmax(scores, axis=-1)
    ctx = jnp.einsum("bhqk,bhkd->bhqd", probs, vh)
    return ctx.transpose(0, 2, 1, 3).reshape(B, S, H)


if __name__ == "__main__":
    key = jax.random.PRNGKey(0)
    k_x, k_wq, k_wk, k_wv, k_bq, k_bk, k_bv, k_m = jax.random.split(key, 8)

    x = jax.random.normal(k_x, (BATCH, SEQ, HIDDEN), jnp.float32)
    # deterministic synthetic parameters; weights stored as (in, out)
    wq = jax.random.normal(k_wq, (HIDDEN, HIDDEN), jnp.float32) * 0.05
    wk = jax.random.normal(k_wk, (HIDDEN, HIDDEN), jnp.float32) * 0.05
    wv = jax.random.normal(k_wv, (HIDDEN, HIDDEN), jnp.float32) * 0.05
    bq = jax.random.normal(k_bq, (1, HIDDEN), jnp.float32) * 0.01
    bk = jax.random.normal(k_bk, (1, HIDDEN), jnp.float32) * 0.01
    bv = jax.random.normal(k_bv, (1, HIDDEN), jnp.float32) * 0.01
    # additive attention mask (0 / -10000 style); dense and finite
    attention_mask = (jax.random.uniform(k_m, (BATCH, 1, SEQ, SEQ)) < 0.2
                      ).astype(jnp.float32) * -10000.0

    # One-time parameter fusion, hoisted out of the per-call path.
    wqkv, bqkv = fuse_qkv_params(wq, wk, wv, bq, bk, bv)

    out = bert_self_attention(x, wqkv, bqkv, attention_mask)
    out = jax.block_until_ready(out)

    ref = reference_attention(x, wq, wk, wv, bq, bk, bv, attention_mask)
    assert out.shape == (BATCH, SEQ, HIDDEN)
    # exact softmax now -> tight tolerance
    assert jnp.allclose(out, ref, atol=1e-4, rtol=1e-4), "mismatch vs reference"

    print("KERNEL_OK")
</pallas_src>

<mosaic_0001>
module attributes {stable_mosaic.version = 11 : i64} {
  func.func @bert_self_attention_kernel(%arg0: i32, %arg1: memref<8x32xf32, #tpu.memory_space<vmem>>, %arg2: memref<32x96xf32, #tpu.memory_space<vmem>>, %arg3: memref<1x96xf32, #tpu.memory_space<vmem>>, %arg4: memref<32x32xf32, #tpu.memory_space<vmem>>, %arg5: memref<8x128xf32, #tpu.memory_space<vmem>>) attributes {dimension_semantics = [#tpu.dimension_semantics<parallel>], iteration_bounds = array<i64: 2>, scalar_prefetch = 0 : i64, scratch_operands = 0 : i64, tpu.core_type = #tpu.core_type<tc>, window_params = [{transform_indices = @transform_0, window_bounds = array<i64: 8, 32>}, {pipeline_mode = #tpu.pipeline_mode<synchronous>, transform_indices = @transform_1, window_bounds = array<i64: 32, 96>}, {pipeline_mode = #tpu.pipeline_mode<synchronous>, transform_indices = @transform_2, window_bounds = array<i64: 1, 96>}, {transform_indices = @transform_3, window_bounds = array<i64: 32, 32>}, {transform_indices = @transform_4, window_bounds = array<i64: 8, 128>}]} {
    %c0 = arith.constant 0 : index
    %c0_0 = arith.constant 0 : index
    %0 = vector.load %arg1[%c0, %c0_0] : memref<8x32xf32, #tpu.memory_space<vmem>>, vector<8x32xf32>
    %c0_1 = arith.constant 0 : index
    %c0_2 = arith.constant 0 : index
    %1 = vector.load %arg2[%c0_1, %c0_2] : memref<32x96xf32, #tpu.memory_space<vmem>>, vector<32x96xf32>
    %cst = arith.constant dense<0.000000e+00> : vector<8x96xf32>
    %2 = tpu.matmul %0, %1, %cst {dimension_numbers = #tpu.dot_dimension_numbers<[1], [0], [0], [1], [0, 0, 1, 1], [], []>} : vector<8x32xf32>, vector<32x96xf32>, vector<8x96xf32> -> vector<8x96xf32>
    %c0_3 = arith.constant 0 : index
    %c0_4 = arith.constant 0 : index
    %3 = vector.load %arg3[%c0_3, %c0_4] : memref<1x96xf32, #tpu.memory_space<vmem>>, vector<1x96xf32>
    %4 = vector.broadcast %3 : vector<1x96xf32> to vector<8x96xf32>
    %5 = arith.addf %2, %4 : vector<8x96xf32>
    %6 = vector.extract_strided_slice %5 {offsets = [0, 0], sizes = [8, 8], strides = [1, 1]} : vector<8x96xf32> to vector<8x8xf32>
    %7 = vector.extract_strided_slice %5 {offsets = [0, 8], sizes = [8, 8], strides = [1, 1]} : vector<8x96xf32> to vector<8x8xf32>
    %8 = vector.extract_strided_slice %5 {offsets = [0, 16], sizes = [8, 8], strides = [1, 1]} : vector<8x96xf32> to vector<8x8xf32>
    %9 = vector.extract_strided_slice %5 {offsets = [0, 24], sizes = [8, 8], strides = [1, 1]} : vector<8x96xf32> to vector<8x8xf32>
    %10 = tpu.concatenate %6, %7, %8, %9 in 0 : vector<8x8xf32>, vector<8x8xf32>, vector<8x8xf32>, vector<8x8xf32> -> vector<32x8xf32>
    %11 = vector.extract_strided_slice %5 {offsets = [0, 32], sizes = [8, 8], strides = [1, 1]} : vector<8x96xf32> to vector<8x8xf32>
    %12 = vector.extract_strided_slice %5 {offsets = [0, 40], sizes = [8, 8], strides = [1, 1]} : vector<8x96xf32> to vector<8x8xf32>
    %13 = vector.extract_strided_slice %5 {offsets = [0, 48], sizes = [8, 8], strides = [1, 1]} : vector<8x96xf32> to vector<8x8xf32>
    %14 = vector.extract_strided_slice %5 {offsets = [0, 56], sizes = [8, 8], strides = [1, 1]} : vector<8x96xf32> to vector<8x8xf32>
    %15 = tpu.concatenate %11, %12, %13, %14 in 0 : vector<8x8xf32>, vector<8x8xf32>, vector<8x8xf32>, vector<8x8xf32> -> vector<32x8xf32>
    %16 = vector.extract_strided_slice %5 {offsets = [0, 64], sizes = [8, 8], strides = [1, 1]} : vector<8x96xf32> to vector<8x8xf32>
    %17 = vector.extract_strided_slice %5 {offsets = [0, 72], sizes = [8, 8], strides = [1, 1]} : vector<8x96xf32> to vector<8x8xf32>
    %18 = vector.extract_strided_slice %5 {offsets = [0, 80], sizes = [8, 8], strides = [1, 1]} : vector<8x96xf32> to vector<8x8xf32>
    %19 = vector.extract_strided_slice %5 {offsets = [0, 88], sizes = [8, 8], strides = [1, 1]} : vector<8x96xf32> to vector<8x8xf32>
    %20 = tpu.concatenate %16, %17, %18, %19 in 0 : vector<8x8xf32>, vector<8x8xf32>, vector<8x8xf32>, vector<8x8xf32> -> vector<32x8xf32>
    %cst_5 = arith.constant dense<0.000000e+00> : vector<32x32xf32>
    %21 = tpu.matmul %10, %15, %cst_5 {dimension_numbers = #tpu.dot_dimension_numbers<[1], [1], [0], [0], [0, 0, 1, 0], [], []>} : vector<32x8xf32>, vector<32x8xf32>, vector<32x32xf32> -> vector<32x32xf32>
    %c0_6 = arith.constant 0 : index
    %c0_7 = arith.constant 0 : index
    %22 = vector.load %arg4[%c0_6, %c0_7] : memref<32x32xf32, #tpu.memory_space<vmem>>, vector<32x32xf32>
    %23 = arith.addf %21, %22 : vector<32x32xf32>
    %cst_8 = arith.constant dense<0xFF800000> : vector<32xf32>
    %24 = vector.multi_reduction <maximumf>, %23, %cst_8 [1] : vector<32x32xf32> to vector<32xf32>
    %25 = vector.shape_cast %24 : vector<32xf32> to vector<32x1xf32>
    %26 = vector.broadcast %25 : vector<32x1xf32> to vector<32x32xf32>
    %27 = arith.subf %23, %26 : vector<32x32xf32>
    %28 = math.exp %27 : vector<32x32xf32>
    %cst_9 = arith.constant dense<0.000000e+00> : vector<32xf32>
    %29 = vector.multi_reduction <add>, %28, %cst_9 [1] : vector<32x32xf32> to vector<32xf32>
    %30 = vector.shape_cast %29 : vector<32xf32> to vector<32x1xf32>
    %31 = vector.broadcast %30 : vector<32x1xf32> to vector<32x32xf32>
    %32 = arith.divf %28, %31 : vector<32x32xf32>
    %cst_10 = arith.constant dense<0.000000e+00> : vector<32x8xf32>
    %33 = tpu.matmul %32, %20, %cst_10 {dimension_numbers = #tpu.dot_dimension_numbers<[1], [0], [0], [1], [0, 0, 1, 1], [], []>} : vector<32x32xf32>, vector<32x8xf32>, vector<32x8xf32> -> vector<32x8xf32>
    %34 = vector.extract_strided_slice %33 {offsets = [0, 0], sizes = [8, 8], strides = [1, 1]} : vector<32x8xf32> to vector<8x8xf32>
    %35 = vector.extract_strided_slice %33 {offsets = [8, 0], sizes = [8, 8], strides = [1, 1]} : vector<32x8xf32> to vector<8x8xf32>
    %36 = vector.extract_strided_slice %33 {offsets = [16, 0], sizes = [8, 8], strides = [1, 1]} : vector<32x8xf32> to vector<8x8xf32>
    %37 = vector.extract_strided_slice %33 {offsets = [24, 0], sizes = [8, 8], strides = [1, 1]} : vector<32x8xf32> to vector<8x8xf32>
    %38 = tpu.concatenate %34, %35, %36, %37 in 1 : vector<8x8xf32>, vector<8x8xf32>, vector<8x8xf32>, vector<8x8xf32> -> vector<8x32xf32>
    %cst_11 = arith.constant 0.000000e+00 : f32
    %39 = vector.broadcast %cst_11 : f32 to vector<8x96xf32>
    %40 = tpu.concatenate %38, %39 in 1 : vector<8x32xf32>, vector<8x96xf32> -> vector<8x128xf32>
    %c0_12 = arith.constant 0 : index
    %c0_13 = arith.constant 0 : index
    %41 = vector.load %arg5[%c0_12, %c0_13] : memref<8x128xf32, #tpu.memory_space<vmem>>, vector<8x128xf32>
    tpu.vector_store %arg5[%c0_12, %c0_13], %40 {strides = array<i32>} : memref<8x128xf32, #tpu.memory_space<vmem>>, vector<8x128xf32>,
    return
  }
  func.func @transform_0(%arg0: i32) -> (i32, i32) {
    %c0_i32 = arith.constant 0 : i32
    %c0_i32_0 = arith.constant 0 : i32
    return %arg0, %c0_i32 : i32, i32
  }
  func.func @transform_1(%arg0: i32) -> (i32, i32) {
    %c0_i32 = arith.constant 0 : i32
    %c0_i32_0 = arith.constant 0 : i32
    %c0_i32_1 = arith.constant 0 : i32
    return %c0_i32, %c0_i32_0 : i32, i32
  }
  func.func @transform_2(%arg0: i32) -> (i32, i32) {
    %c0_i32 = arith.constant 0 : i32
    %c0_i32_0 = arith.constant 0 : i32
    %c0_i32_1 = arith.constant 0 : i32
    return %c0_i32, %c0_i32_0 : i32, i32
  }
  func.func @transform_3(%arg0: i32) -> (i32, i32) {
    %c0_i32 = arith.constant 0 : i32
    %c0_i32_0 = arith.constant 0 : i32
    return %arg0, %c0_i32 : i32, i32
  }
  func.func @transform_4(%arg0: i32) -> (i32, i32) {
    %c0_i32 = arith.constant 0 : i32
    %c0_i32_0 = arith.constant 0 : i32
    return %arg0, %c0_i32 : i32, i32
  }
}

</mosaic_0001>

<llo_original>
// kernel: tpu_custom_call.1
$region0: #{tpu_custom_call.1}
  #allocation0 [shape = 'u32[]', space=smem, size = 0x4, offset = 0x4, fixed_abs, tag = 'smem constant byte address 0x4 - core index']
  #allocation1 [shape = 'u32[144,128]{1,0:T(1,128)}', space=vmem, size = 0x12000, scoped, tag = 'internal scratch']
  %s0 = inlined_call_operand.vmem [shape: f32[16,32], index: 0, kind: input, shape index: {}]
  %s1 = inlined_call_operand.vmem [shape: f32[32,96], index: 1, kind: input, shape index: {}]
  %s2 = inlined_call_operand.vmem [shape: f32[1,96], index: 2, kind: input, shape index: {}]
  %s3 = inlined_call_operand.vmem [shape: f32[64,32], index: 3, kind: input, shape index: {}]
  %s4 = inlined_call_operand.hbm [shape: f32[16,128], index: 4, kind: output, shape index: {}]
  %s5 = sld [smem:[#allocation0]]
  $region49: #{tpu_custom_call.1} parent=0
    _
  %s7 = ssub.s32 1, %s5
  %s8 = scalar_select 0, %s7, %s5
  $region1: #{tpu_custom_call.1} parent=0
    #allocation2 [shape = 'u8[8192]{0}', space=vmem, size = 0x2000, scoped, tag = 'output window, operand 0']
    #allocation3 [shape = 's32[2]{0}', space=sflag, size = 0x8, scoped, tag = 'scoped memory for tpu_custom_call.1']
    %9 = vsyncpa [#allocation3], 0
    %s10 = scalar_lea.sflag [#allocation3], 1
    %11 = vsyncpa %s10, 0
    loop: start=0, step=1, limit=4
    $region2: #{tpu_custom_call.1} parent=1 // loop_pre_header
      _
    $region3: #{tpu_custom_call.1} parent=1 // loop_header
      %s13 = sphi 0, %s17
      %p14 = scmp.ge.s32.totalorder %s13, 4
      %s23 = sphi 0, %s25
      %s26 = sphi 0, %s23
      %s27 = sphi 0, %s26
      %s43 = sphi 0, %s27
      %s47 = sphi 0, %s47
      %s49 = sphi 0, %s47
      %s50 = sphi 0, %s49
      %s64 = sphi 0, %s50
      %s68 = sphi 0, %s68
      %s70 = sphi 0, %s68
      %s71 = sphi 0, %s70
      %s85 = sphi 0, %s71
      %s91 = sphi 0, %s93
      %s94 = sphi 0, %s91
      %s95 = sphi 0, %s94
      %s111 = sphi 0, %s95
      %s117 = sphi 0, %s119
      %s120 = sphi 0, %s117
      %s121 = sphi 0, %s120
      %s137 = sphi 0, %s121
    $region4: #{tpu_custom_call.1} parent=1 // loop_header_branch
      %16 = sbr.rel (%p14) target = $region8
    $region5: #{tpu_custom_call.1} parent=1 // loop_body
      %s18 = ssub.s32 %s13, 1
      %s19 = ssub.s32 %s13, 2
      %s20 = sadd.s32 %s13, 1
      %s21 = ssub.s32 %s13, %s20
      %p22 = scmp.eq.s32.totalorder %s21, 0
      %s24 = sadd.s32 %s23, 1
      %s25 = scalar_select %p22, %s23, %s24
      %p28 = pneg %p22
      %p29 = scmp.eq.s32.totalorder %s13, 1
      %p30 = por %p28, %p29
      %p31 = scmp.ne.s32.totalorder %s23, %s26
      %p32 = scmp.eq.s32.totalorder %s13, 0
      %p33 = por %p31, %p32
      %p34 = scmp.ne.s32.totalorder %s23, %s26
      %p35 = scmp.eq.s32.totalorder %s18, 1
      %p36 = por %p34, %p35
      %p37 = scmp.ne.s32.totalorder %s26, %s27
      %p38 = scmp.eq.s32.totalorder %s18, 0
      %p39 = por %p37, %p38
      %p40 = scmp.ne.s32.totalorder %s26, %s27
      %p41 = scmp.eq.s32.totalorder %s19, 1
      %p42 = por %p40, %p41
      %p44 = scmp.ne.s32.totalorder %s27, %s43
      %p45 = scmp.eq.s32.totalorder %s19, 0
      %p46 = por %p44, %p45
      %s48 = sadd.s32 %s47, 1
      %p51 = scmp.eq.s32.totalorder %s13, 1
      %p52 = scmp.ne.s32.totalorder %s47, %s49
      %p53 = scmp.eq.s32.totalorder %s13, 0
      %p54 = por %p52, %p53
      %p55 = scmp.ne.s32.totalorder %s47, %s49
      %p56 = scmp.eq.s32.totalorder %s18, 1
      %p57 = por %p55, %p56
      %p58 = scmp.ne.s32.totalorder %s49, %s50
      %p59 = scmp.eq.s32.totalorder %s18, 0
      %p60 = por %p58, %p59
      %p61 = scmp.ne.s32.totalorder %s49, %s50
      %p62 = scmp.eq.s32.totalorder %s19, 1
      %p63 = por %p61, %p62
      %p65 = scmp.ne.s32.totalorder %s50, %s64
      %p66 = scmp.eq.s32.totalorder %s19, 0
      %p67 = por %p65, %p66
      %s69 = sadd.s32 %s68, 1
      %p72 = scmp.eq.s32.totalorder %s13, 1
      %p73 = scmp.ne.s32.totalorder %s68, %s70
      %p74 = scmp.eq.s32.totalorder %s13, 0
      %p75 = por %p73, %p74
      %p76 = scmp.ne.s32.totalorder %s68, %s70
      %p77 = scmp.eq.s32.totalorder %s18, 1
      %p78 = por %p76, %p77
      %p79 = scmp.ne.s32.totalorder %s70, %s71
      %p80 = scmp.eq.s32.totalorder %s18, 0
      %p81 = por %p79, %p80
      %p82 = scmp.ne.s32.totalorder %s70, %s71
      %p83 = scmp.eq.s32.totalorder %s19, 1
      %p84 = por %p82, %p83
      %p86 = scmp.ne.s32.totalorder %s71, %s85
      %p87 = scmp.eq.s32.totalorder %s19, 0
      %p88 = por %p86, %p87
      %s89 = ssub.s32 %s13, %s20
      %p90 = scmp.eq.s32.totalorder %s89, 0
      %s92 = sadd.s32 %s91, 1
      %s93 = scalar_select %p90, %s91, %s92
      %p96 = pneg %p90
      %p97 = scmp.eq.s32.totalorder %s13, 1
      %p98 = por %p96, %p97
      %p99 = scmp.ne.s32.totalorder %s91, %s94
      %p100 = scmp.eq.s32.totalorder %s13, 0
      %p101 = por %p99, %p100
      %p102 = scmp.ne.s32.totalorder %s91, %s94
      %p103 = scmp.eq.s32.totalorder %s18, 1
      %p104 = por %p102, %p103
      %p105 = scmp.ne.s32.totalorder %s94, %s95
      %p106 = scmp.eq.s32.totalorder %s18, 0
      %p107 = por %p105, %p106
      %p108 = scmp.ne.s32.totalorder %s94, %s95
      %p109 = scmp.eq.s32.totalorder %s19, 1
      %p110 = por %p108, %p109
      %p112 = scmp.ne.s32.totalorder %s95, %s111
      %p113 = scmp.eq.s32.totalorder %s19, 0
      %p114 = por %p112, %p113
      %s115 = ssub.s32 %s13, %s20
      %p116 = scmp.eq.s32.totalorder %s115, 0
      %s118 = sadd.s32 %s117, 1
      %s119 = scalar_select %p116, %s117, %s118
      %p122 = pneg %p116
      %p123 = scmp.eq.s32.totalorder %s13, 1
      %p124 = por %p122, %p123
      %p125 = scmp.ne.s32.totalorder %s117, %s120
      %p126 = scmp.eq.s32.totalorder %s13, 0
      %p127 = por %p125, %p126
      %p128 = scmp.ne.s32.totalorder %s117, %s120
      %p129 = scmp.eq.s32.totalorder %s18, 1
      %p130 = por %p128, %p129
      %p131 = scmp.ne.s32.totalorder %s120, %s121
      %p132 = scmp.eq.s32.totalorder %s18, 0
      %p133 = por %p131, %p132
      %p134 = scmp.ne.s32.totalorder %s120, %s121
      %p135 = scmp.eq.s32.totalorder %s19, 1
      %p136 = por %p134, %p135
      %p138 = scmp.ne.s32.totalorder %s121, %s137
      %p139 = scmp.eq.s32.totalorder %s19, 0
      %p140 = por %p138, %p139
      %p141 = scmp.le.s32.totalorder 1, %s13
      %p142 = scmp.lt.s32.totalorder %s13, 3
      %p143 = pnand %p141, %p142
      %p144 = pneg %p143
      // Predicated region
      $region9: #{tpu_custom_call.1} parent=5 // pred_check
        _
      $region10: #{tpu_custom_call.1} parent=5 // pred_check_branch
        %146 = sbr.rel (%p143) target = $region12
      $region11: #{tpu_custom_call.1} parent=5 // pred_region
        %s147 = ssub.s32 %s13, 1
        // Predicated region
        $region13: #{tpu_custom_call.1} parent=11 // pred_check
          %p148 = pneg %p60
        $region14: #{tpu_custom_call.1} parent=11 // pred_check_branch
          %150 = sbr.rel (%p148) target = $region16
        $region15: #{tpu_custom_call.1} parent=11 // pred_region
          _
        $region16: #{tpu_custom_call.1} parent=11 // pred_fallthru
          _
        // Predicated region
        $region17: #{tpu_custom_call.1} parent=11 // pred_check
          %p151 = pneg %p81
        $region18: #{tpu_custom_call.1} parent=11 // pred_check_branch
          %153 = sbr.rel (%p151) target = $region20
        $region19: #{tpu_custom_call.1} parent=11 // pred_region
          _
        $region20: #{tpu_custom_call.1} parent=11 // pred_fallthru
          _
      $region12: #{tpu_custom_call.1} parent=5 // pred_fallthru
        _
      %p154 = scmp.lt.s32.totalorder %s13, 2
      // Predicated region
      $region21: #{tpu_custom_call.1} parent=5 // pred_check
        %p155 = pneg %p154
      $region22: #{tpu_custom_call.1} parent=5 // pred_check_branch
        %157 = sbr.rel (%p155) target = $region24
      $region23: #{tpu_custom_call.1} parent=5 // pred_region
        // Predicated region
        $region25: #{tpu_custom_call.1} parent=23 // pred_check
          %p158 = pneg %p33
        $region26: #{tpu_custom_call.1} parent=23 // pred_check_branch
          %160 = sbr.rel (%p158) target = $region28
        $region27: #{tpu_custom_call.1} parent=23 // pred_region
          %p161 = scmp.lt.s32.totalorder %s13, 1
          %s162 = scalar_select %p161, %s13, 1
          %s163 = smul.addr %s162, 8
          %s164 = scalar_lea.vmem %s0, %s163
        $region28: #{tpu_custom_call.1} parent=23 // pred_fallthru
          _
        // Predicated region
        $region29: #{tpu_custom_call.1} parent=23 // pred_check
          %p165 = pneg %p101
        $region30: #{tpu_custom_call.1} parent=23 // pred_check_branch
          %167 = sbr.rel (%p165) target = $region32
        $region31: #{tpu_custom_call.1} parent=23 // pred_region
          %s168 = smul.u32 4, %s13
          %p169 = scmp.lt.s32.totalorder %s168, 7
          %s170 = scalar_select %p169, %s168, 7
          %s171 = smul.addr %s170, 8
          %s172 = scalar_lea.vmem %s3, %s171
          %s173 = smul.u32 4, %s13
        $region32: #{tpu_custom_call.1} parent=23 // pred_fallthru
          _
      $region24: #{tpu_custom_call.1} parent=5 // pred_fallthru
        _
      %p174 = scmp.le.s32.totalorder 1, %s13
      %p175 = scmp.lt.s32.totalorder %s13, 3
      %p176 = pnand %p174, %p175
      %p177 = pneg %p176
      // Predicated region
      $region33: #{tpu_custom_call.1} parent=5 // pred_check
        _
      $region34: #{tpu_custom_call.1} parent=5 // pred_check_branch
        %179 = sbr.rel (%p176) target = $region36
      $region35: #{tpu_custom_call.1} parent=5 // pred_region
        %s180 = ssub.s32 %s13, 1
        %p181 = scmp.lt.s32.totalorder %s18, 1
        %s182 = scalar_select %p181, %s18, 1
        %s183 = smul.addr %s182, 8
        %s184 = scalar_lea.vmem %s0, %s183
        %p185 = pneg %p39
        %p186 = pneg %p36
        %p187 = pneg %p60
        %p188 = pneg %p57
        %p189 = pneg %p81
        %p190 = pneg %p78
        %s191 = smul.u32 4, %s18
        %p192 = scmp.lt.s32.totalorder %s191, 7
        %s193 = scalar_select %p192, %s191, 7
        %s194 = smul.addr %s193, 8
        %s195 = scalar_lea.vmem %s3, %s194
        %p196 = pneg %p107
        %p197 = pneg %p104
        %p198 = pneg %p133
        %p199 = pneg %p130
        %s200 = sand.u32 %s120, 1
        %s201 = scalar_lea.sflag [#allocation3], %s200
        %s202 = sand.u32 %s120, 1
        %s203 = smul.addr %s202, 8
        %s204 = scalar_lea.vmem [#allocation2], %s203
        %p205 = scmp.lt.s32.totalorder %s18, 1
        %s206 = scalar_select %p205, %s18, 1
        %s207 = smul.addr %s206, 8
        %s208 = scalar_lea.vmem %s0, %s207
        %s209 = smul.u32 4, %s18
        %p210 = scmp.lt.s32.totalorder %s209, 7
        %s211 = scalar_select %p210, %s209, 7
        %s212 = smul.addr %s211, 8
        %s213 = scalar_lea.vmem %s3, %s212
        %s214 = smul.u32 4, %s18
        %v215 = vld [vmem:[%s208] sm:$0xff]
        %v216 = vld [vmem:[%s1] sm:$0xff]
        %v217 = vld [vmem:[%s1 + $0x8] sm:$0xff]
        %v218 = vld [vmem:[%s1 + $0x10] sm:$0xff]
        %v219 = vld [vmem:[%s1 + $0x18] sm:$0xff]
        %v220 = vld [vmem:[%s2] sm:$0x1]
        %v222 = vlaneseq
        %v223 = vshrl.u32 %v222, 7
        %v224 = vsub.s32 0, %v223
        %v225 = vrot.slane %v220, %v224
        %vm227 = vcmask 261120
        %v229 = vsel %vm227, %v215, 0
        %231 = vmatprep.subr.mxu0 0.0
        %232 = vmatpush1.msra.mxu0 %v216
        %233 = vmatprep.subr.mxu0 0.0
        %234 = vmatpush1.msra.mxu0 %v217
        %235 = vmatprep.subr.mxu0 0.0
        %236 = vmatpush1.msra.mxu0 %v218
        %237 = vmatprep.subr.mxu0 0.0
        %238 = vmatpush1.msra.mxu0 %v219
        %239 = vmatprep.subr.mxu0 0.0
        %240 = vmatpush1.msra.mxu0 0.0
        %241 = vmatprep.subr.mxu0 0.0
        %242 = vmatpush1.msra.mxu0 0.0
        %243 = vmatprep.subr.mxu0 0.0
        %244 = vmatpush1.msra.mxu0 0.0
        %245 = vmatprep.subr.mxu0 0.0
        %246 = vmatpush1.msra.mxu0 0.0
        %247 = vmatprep.subr.mxu0 0.0
        %248 = vmatpush1.msra.mxu0 0.0
        %249 = vmatprep.subr.mxu0 0.0
        %250 = vmatpush1.msra.mxu0 0.0
        %251 = vmatprep.subr.mxu0 0.0
        %252 = vmatpush1.msra.mxu0 0.0
        %253 = vmatprep.subr.mxu0 0.0
        %254 = vmatpush1.msra.mxu0 0.0
        %255 = vmatprep.subr.mxu0 0.0
        %256 = vmatpush1.msra.mxu0 0.0
        %257 = vmatprep.subr.mxu0 0.0
        %258 = vmatpush1.msra.mxu0 0.0
        %259 = vmatprep.subr.mxu0 0.0
        %260 = vmatpush1.msra.mxu0 0.0
        %261 = vmatprep.subr.mxu0 0.0
        %262 = vmatpush1.msra.mxu0 0.0
        %263 = vmatprep.subr.mxu0 0.0
        %264 = vmatpush1.msra.mxu0 0.0
        %265 = vmatprep.subr.mxu0 0.0
        %266 = vmatpush1.msra.mxu0 0.0
        %267 = vmatprep.subr.mxu0 0.0
        %268 = vmatpush1.msra.mxu0 0.0
        %269 = vmatprep.subr.mxu0 0.0
        %270 = vmatpush1.msra.mxu0 0.0
        %271 = vmatprep.subr.mxu0 0.0
        %272 = vmatpush1.msra.mxu0 0.0
        %273 = vmatprep.subr.mxu0 0.0
        %274 = vmatpush1.msra.mxu0 0.0
        %275 = vmatprep.subr.mxu0 0.0
        %276 = vmatpush1.msra.mxu0 0.0
        %277 = vmatprep.subr.mxu0 0.0
        %278 = vmatpush1.msra.mxu0 0.0
        %279 = vmatprep.subr.mxu0 0.0
        %280 = vmatpush1.msra.mxu0 0.0
        %281 = vmatprep.subr.mxu0 0.0
        %282 = vmatpush1.msra.mxu0 0.0
        %283 = vmatprep.subr.mxu0 0.0
        %284 = vmatpush1.msra.mxu0 0.0
        %285 = vmatprep.subr.mxu0 0.0
        %286 = vmatpush1.msra.mxu0 0.0
        %287 = vmatprep.subr.mxu0 0.0
        %288 = vmatpush1.msra.mxu0 0.0
        %289 = vmatprep.subr.mxu0 0.0
        %290 = vmatpush1.msra.mxu0 0.0
        %291 = vmatprep.subr.mxu0 0.0
        %292 = vmatpush1.msra.mxu0 0.0
        %293 = vmatprep.subr.mxu0 0.0
        %294 = vmatpush1.msra.mxu0 0.0
        %295 = vmatprep.mubr.f32.mxu0 0.0
        %296 = vmatmul.mubr.f32.gmra.mrb[0].mxu0 %v229
        %v297 = vpop.f32.mrb[0].mxu0
        %v298 = vadd.f32 %v225, %v297
        %v299 = vpop.f32.mrb[0].mxu0
        %300 = vdwg.mxu0
        %302 = vrot.lane.b32.xlu0 %v298, 120
        %v303 = vpop.permute.xlu0 %302
        %304 = vrot.lane.b32.xlu0 %v298, 112
        %v305 = vpop.permute.xlu0 %304
        %306 = vrot.lane.b32.xlu0 %v298, 104
        %v307 = vpop.permute.xlu0 %306
        %v308 = vld [vmem:[%s213] sm:$0xff]
        %v309 = vld [vmem:[%s213 + $0x8] sm:$0xff]
        %v310 = vld [vmem:[%s213 + $0x10] sm:$0xff]
        %v311 = vld [vmem:[%s213 + $0x18] sm:$0xff]
        %312 = vrot.lane.b32.xlu0 %v298, 96
        %v313 = vpop.permute.xlu0 %312
        %314 = vrot.lane.b32.xlu0 %v303, 96
        %v315 = vpop.permute.xlu0 %314
        %316 = vrot.lane.b32.xlu0 %v305, 96
        %v317 = vpop.permute.xlu0 %316
        %318 = vrot.lane.b32.xlu0 %v307, 96
        %v319 = vpop.permute.xlu0 %318
        %vm320 = vcmask 64512
        %v321 = vsel %vm320, %v298, 0
        %v323 = vsel %vm320, %v303, 0
        %v325 = vsel %vm320, %v305, 0
        %v327 = vsel %vm320, %v307, 0
        %v329 = vsel %vm320, %v313, 0
        %v331 = vsel %vm320, %v315, 0
        %v333 = vsel %vm320, %v317, 0
        %v335 = vsel %vm320, %v319, 0
        %337 = vmatprep.subr.mxu0 0.0
        %338 = vmatpush1.xpose.msra.mxu0 %v329
        %339 = vmatprep.subr.mxu0 0.0
        %340 = vmatpush1.xpose.msra.mxu0 %v331
        %341 = vmatprep.subr.mxu0 0.0
        %342 = vmatpush1.xpose.msra.mxu0 %v333
        %343 = vmatprep.subr.mxu0 0.0
        %344 = vmatpush1.xpose.msra.mxu0 %v335
        %345 = vmatprep.subr.mxu0 0.0
        %346 = vmatpush1.xpose.msra.mxu0 0.0
        %347 = vmatprep.subr.mxu0 0.0
        %348 = vmatpush1.xpose.msra.mxu0 0.0
        %349 = vmatprep.subr.mxu0 0.0
        %350 = vmatpush1.xpose.msra.mxu0 0.0
        %351 = vmatprep.subr.mxu0 0.0
        %352 = vmatpush1.xpose.msra.mxu0 0.0
        %353 = vmatprep.subr.mxu0 0.0
        %354 = vmatpush1.xpose.msra.mxu0 0.0
        %355 = vmatprep.subr.mxu0 0.0
        %356 = vmatpush1.xpose.msra.mxu0 0.0
        %357 = vmatprep.subr.mxu0 0.0
        %358 = vmatpush1.xpose.msra.mxu0 0.0
        %359 = vmatprep.subr.mxu0 0.0
        %360 = vmatpush1.xpose.msra.mxu0 0.0
        %361 = vmatprep.subr.mxu0 0.0
        %362 = vmatpush1.xpose.msra.mxu0 0.0
        %363 = vmatprep.subr.mxu0 0.0
        %364 = vmatpush1.xpose.msra.mxu0 0.0
        %365 = vmatprep.subr.mxu0 0.0
        %366 = vmatpush1.xpose.msra.mxu0 0.0
        %367 = vmatprep.subr.mxu0 0.0
        %368 = vmatpush1.xpose.msra.mxu0 0.0
        %369 = vmatprep.subr.mxu0 0.0
        %370 = vmatpush1.xpose.msra.mxu0 0.0
        %371 = vmatprep.subr.mxu0 0.0
        %372 = vmatpush1.xpose.msra.mxu0 0.0
        %373 = vmatprep.subr.mxu0 0.0
        %374 = vmatpush1.xpose.msra.mxu0 0.0
        %375 = vmatprep.subr.mxu0 0.0
        %376 = vmatpush1.xpose.msra.mxu0 0.0
        %377 = vmatprep.subr.mxu0 0.0
        %378 = vmatpush1.xpose.msra.mxu0 0.0
        %379 = vmatprep.subr.mxu0 0.0
        %380 = vmatpush1.xpose.msra.mxu0 0.0
        %381 = vmatprep.subr.mxu0 0.0
        %382 = vmatpush1.xpose.msra.mxu0 0.0
        %383 = vmatprep.subr.mxu0 0.0
        %384 = vmatpush1.xpose.msra.mxu0 0.0
        %385 = vmatprep.subr.mxu0 0.0
        %386 = vmatpush1.xpose.msra.mxu0 0.0
        %387 = vmatprep.subr.mxu0 0.0
        %388 = vmatpush1.xpose.msra.mxu0 0.0
        %389 = vmatprep.subr.mxu0 0.0
        %390 = vmatpush1.xpose.msra.mxu0 0.0
        %391 = vmatprep.subr.mxu0 0.0
        %392 = vmatpush1.xpose.msra.mxu0 0.0
        %393 = vmatprep.subr.mxu0 0.0
        %394 = vmatpush1.xpose.msra.mxu0 0.0
        %395 = vmatprep.subr.mxu0 0.0
        %396 = vmatpush1.xpose.msra.mxu0 0.0
        %397 = vmatprep.subr.mxu0 0.0
        %398 = vmatpush1.xpose.msra.mxu0 0.0
        %399 = vmatprep.subr.mxu0 0.0
        %400 = vmatpush1.xpose.msra.mxu0 0.0
        %401 = vmatprep.mubr.f32.mxu0 0.0
        %402 = vmatmul.mubr.f32.gmra.mrb[0].mxu0 %v321
        %v403 = vpop.f32.mrb[0].mxu0
        %v404 = vadd.f32 %v308, %v403
        %v405 = vpop.f32.mrb[0].mxu0
        %406 = vmatprep.mubr.f32.mxu0 0.0
        %407 = vmatmul.mubr.f32.gmra.mrb[0].mxu0 %v323
        %v408 = vpop.f32.mrb[0].mxu0
        %v409 = vadd.f32 %v309, %v408
        %v410 = vpop.f32.mrb[0].mxu0
        %411 = vmatprep.mubr.f32.mxu0 0.0
        %412 = vmatmul.mubr.f32.gmra.mrb[0].mxu0 %v325
        %v413 = vpop.f32.mrb[0].mxu0
        %v414 = vadd.f32 %v310, %v413
        %v415 = vpop.f32.mrb[0].mxu0
        %416 = vmatprep.mubr.f32.mxu0 0.0
        %417 = vmatmul.mubr.f32.gmra.mrb[0].mxu0 %v327
        %v418 = vpop.f32.mrb[0].mxu0
        %v419 = vadd.f32 %v311, %v418
        %v420 = vpop.f32.mrb[0].mxu0
        %421 = vdwg.mxu0
        %v422 = vsel %vm227, %v404, -inf
        %423 = vmax.xlane.f32.xlu0 %v422
        %v424 = vpop.xlane.xlu0 %423
        %v425 = vsel %vm227, %v409, -inf
        %426 = vmax.xlane.f32.xlu0 %v425
        %v427 = vpop.xlane.xlu0 %426
        %v428 = vsel %vm227, %v414, -inf
        %429 = vmax.xlane.f32.xlu0 %v428
        %v430 = vpop.xlane.xlu0 %429
        %v431 = vsel %vm227, %v419, -inf
        %432 = vmax.xlane.f32.xlu0 %v431
        %v433 = vpop.xlane.xlu0 %432
        %v434 = vsub.f32 %v404, %v424
        %v435 = vsub.f32 %v409, %v427
        %v436 = vsub.f32 %v414, %v430
        %v437 = vsub.f32 %v419, %v433
        %v438 = vmul.f32 %v434, 1.442695
        %v439 = vpow.pop %v438
        %v440 = vmul.f32 %v435, 1.442695
        %v441 = vpow.pop %v440
        %v442 = vmul.f32 %v436, 1.442695
        %v443 = vpow.pop %v442
        %v444 = vmul.f32 %v437, 1.442695
        %v445 = vpow.pop %v444
        %v446 = vsel %vm227, %v439, 0.0
        %447 = vadd.xlane.f32.xlu0 %v446
        %v448 = vpop.xlane.xlu0 %447
        %v449 = vsel %vm227, %v441, 0.0
        %450 = vadd.xlane.f32.xlu0 %v449
        %v451 = vpop.xlane.xlu0 %450
        %v452 = vsel %vm227, %v443, 0.0
        %453 = vadd.xlane.f32.xlu0 %v452
        %v454 = vpop.xlane.xlu0 %453
        %v455 = vsel %vm227, %v445, 0.0
        %456 = vadd.xlane.f32.xlu0 %v455
        %v457 = vpop.xlane.xlu0 %456
        %v458 = vrcp.pop %v448
        %v459 = vmul.f32 %v439, %v458
        %v460 = vrcp.pop %v451
        %v461 = vmul.f32 %v441, %v460
        %v462 = vrcp.pop %v454
        %v463 = vmul.f32 %v443, %v462
        %v464 = vrcp.pop %v457
        %v465 = vmul.f32 %v445, %v464
        %466 = vrot.lane.b32.xlu0 %v298, 64
        %v467 = vpop.permute.xlu0 %466
        %468 = vrot.lane.b32.xlu0 %v303, 64
        %v469 = vpop.permute.xlu0 %468
        %470 = vrot.lane.b32.xlu0 %v305, 64
        %v471 = vpop.permute.xlu0 %470
        %472 = vrot.lane.b32.xlu0 %v307, 64
        %v473 = vpop.permute.xlu0 %472
        %v479 = vsel %vm227, %v459, 0
        %v482 = vsel %vm227, %v461, 0
        %v485 = vsel %vm227, %v463, 0
        %v488 = vsel %vm227, %v465, 0
        %490 = vmatprep.subr.mxu0 0.0
        %491 = vmatpush1.msra.mxu0 %v467
        %492 = vmatprep.subr.mxu0 0.0
        %493 = vmatpush1.msra.mxu0 %v469
        %494 = vmatprep.subr.mxu0 0.0
        %495 = vmatpush1.msra.mxu0 %v471
        %496 = vmatprep.subr.mxu0 0.0
        %497 = vmatpush1.msra.mxu0 %v473
        %498 = vmatprep.subr.mxu0 0.0
        %499 = vmatpush1.msra.mxu0 0.0
        %500 = vmatprep.subr.mxu0 0.0
        %501 = vmatpush1.msra.mxu0 0.0
        %502 = vmatprep.subr.mxu0 0.0
        %503 = vmatpush1.msra.mxu0 0.0
        %504 = vmatprep.subr.mxu0 0.0
        %505 = vmatpush1.msra.mxu0 0.0
        %506 = vmatprep.subr.mxu0 0.0
        %507 = vmatpush1.msra.mxu0 0.0
        %508 = vmatprep.subr.mxu0 0.0
        %509 = vmatpush1.msra.mxu0 0.0
        %510 = vmatprep.subr.mxu0 0.0
        %511 = vmatpush1.msra.mxu0 0.0
        %512 = vmatprep.subr.mxu0 0.0
        %513 = vmatpush1.msra.mxu0 0.0
        %514 = vmatprep.subr.mxu0 0.0
        %515 = vmatpush1.msra.mxu0 0.0
        %516 = vmatprep.subr.mxu0 0.0
        %517 = vmatpush1.msra.mxu0 0.0
        %518 = vmatprep.subr.mxu0 0.0
        %519 = vmatpush1.msra.mxu0 0.0
        %520 = vmatprep.subr.mxu0 0.0
        %521 = vmatpush1.msra.mxu0 0.0
        %522 = vmatprep.subr.mxu0 0.0
        %523 = vmatpush1.msra.mxu0 0.0
        %524 = vmatprep.subr.mxu0 0.0
        %525 = vmatpush1.msra.mxu0 0.0
        %526 = vmatprep.subr.mxu0 0.0
        %527 = vmatpush1.msra.mxu0 0.0
        %528 = vmatprep.subr.mxu0 0.0
        %529 = vmatpush1.msra.mxu0 0.0
        %530 = vmatprep.subr.mxu0 0.0
        %531 = vmatpush1.msra.mxu0 0.0
        %532 = vmatprep.subr.mxu0 0.0
        %533 = vmatpush1.msra.mxu0 0.0
        %534 = vmatprep.subr.mxu0 0.0
        %535 = vmatpush1.msra.mxu0 0.0
        %536 = vmatprep.subr.mxu0 0.0
        %537 = vmatpush1.msra.mxu0 0.0
        %538 = vmatprep.subr.mxu0 0.0
        %539 = vmatpush1.msra.mxu0 0.0
        %540 = vmatprep.subr.mxu0 0.0
        %541 = vmatpush1.msra.mxu0 0.0
        %542 = vmatprep.subr.mxu0 0.0
        %543 = vmatpush1.msra.mxu0 0.0
        %544 = vmatprep.subr.mxu0 0.0
        %545 = vmatpush1.msra.mxu0 0.0
        %546 = vmatprep.subr.mxu0 0.0
        %547 = vmatpush1.msra.mxu0 0.0
        %548 = vmatprep.subr.mxu0 0.0
        %549 = vmatpush1.msra.mxu0 0.0
        %550 = vmatprep.subr.mxu0 0.0
        %551 = vmatpush1.msra.mxu0 0.0
        %552 = vmatprep.subr.mxu0 0.0
        %553 = vmatpush1.msra.mxu0 0.0
        %554 = vmatprep.mubr.f32.mxu0 0.0
        %555 = vmatmul.mubr.f32.gmra.mrb[0].mxu0 %v479
        %v556 = vpop.f32.mrb[0].mxu0
        %v557 = vadd.f32 0.0, %v556
        %v558 = vpop.f32.mrb[0].mxu0
        %559 = vmatprep.mubr.f32.mxu0 0.0
        %560 = vmatmul.mubr.f32.gmra.mrb[0].mxu0 %v482
        %v561 = vpop.f32.mrb[0].mxu0
        %v562 = vadd.f32 0.0, %v561
        %v563 = vpop.f32.mrb[0].mxu0
        %564 = vmatprep.mubr.f32.mxu0 0.0
        %565 = vmatmul.mubr.f32.gmra.mrb[0].mxu0 %v485
        %v566 = vpop.f32.mrb[0].mxu0
        %v567 = vadd.f32 0.0, %v566
        %v568 = vpop.f32.mrb[0].mxu0
        %569 = vmatprep.mubr.f32.mxu0 0.0
        %570 = vmatmul.mubr.f32.gmra.mrb[0].mxu0 %v488
        %v571 = vpop.f32.mrb[0].mxu0
        %v572 = vadd.f32 0.0, %v571
        %v573 = vpop.f32.mrb[0].mxu0
        %574 = vdwg.mxu0
        %576 = vrot.lane.b32.xlu0 %v562, 8
        %v577 = vpop.permute.xlu0 %576
        %580 = vrot.lane.b32.xlu0 %v567, 16
        %v581 = vpop.permute.xlu0 %580
        %584 = vrot.lane.b32.xlu0 %v572, 24
        %v585 = vpop.permute.xlu0 %584
        %v587 = vsel %vm320, %v557, %v577
        %vm588 = vcmask 130048
        %v589 = vsel %vm588, %v587, %v581
        %vm590 = vcmask 195584
        %v591 = vsel %vm590, %v589, %v585
        %v592 = vsel %vm227, %v591, 0.0
        %593 = vst [vmem:[%s204] sm:$0xff] %v592
        %s594 = sand.u32 %s120, 1
        %s595 = scalar_lea.sflag [#allocation3], %s594
        %s596 = sand.u32 %s120, 1
        %s597 = smul.addr %s596, 8
        %s598 = scalar_lea.vmem [#allocation2], %s597
        // Predicated region
        $region37: #{tpu_custom_call.1} parent=35 // pred_check
          %p599 = pneg %p130
        $region38: #{tpu_custom_call.1} parent=35 // pred_check_branch
          %601 = sbr.rel (%p599) target = $region40
        $region39: #{tpu_custom_call.1} parent=35 // pred_region
          %s603 = ssub.s32 128, 128
          %604 = vsyncadd %s595, %s603
          %s605 = smul.addr %s18, 128
          %s606 = scalar_lea.hbm %s4, %s605
          %s608 = sshll.u32 %s598, 4
          %s609 = int_to_ptr.vmem [resolvable:$true] %s608
          %611 = dma.vmem_to_hbm [thread:$0]  %s609, 128, %s606, %s595
        $region40: #{tpu_custom_call.1} parent=35 // pred_fallthru
          _
      $region36: #{tpu_custom_call.1} parent=5 // pred_fallthru
        _
      %p612 = scmp.le.s32.totalorder 2, %s13
      // Predicated region
      $region41: #{tpu_custom_call.1} parent=5 // pred_check
        %p613 = pneg %p612
      $region42: #{tpu_custom_call.1} parent=5 // pred_check_branch
        %615 = sbr.rel (%p613) target = $region44
      $region43: #{tpu_custom_call.1} parent=5 // pred_region
        %s616 = ssub.s32 %s13, 2
        // Predicated region
        $region45: #{tpu_custom_call.1} parent=43 // pred_check
          %p617 = pneg %p136
        $region46: #{tpu_custom_call.1} parent=43 // pred_check_branch
          %619 = sbr.rel (%p617) target = $region48
        $region47: #{tpu_custom_call.1} parent=43 // pred_region
          %s620 = sand.u32 %s121, 1
          %s621 = scalar_lea.sflag [#allocation3], %s620
          %s622 = sand.u32 %s121, 1
          %s623 = smul.addr %s622, 8
          %s624 = scalar_lea.vmem [#allocation2], %s623
          %625 = dma.done %s621, 128
        $region48: #{tpu_custom_call.1} parent=43 // pred_fallthru
          _
      $region44: #{tpu_custom_call.1} parent=5 // pred_fallthru
        _
    $region6: #{tpu_custom_call.1} parent=1 // loop_footer
      %s17 = sadd.s32 1, %s13
    $region7: #{tpu_custom_call.1} parent=1 // loop_footer_branch
      %12 = sbr.rel target = $region3
    $region8: #{tpu_custom_call.1} parent=1 // loop_exit
      _
    %626 = vsyncpa [#allocation3], 1
    %s627 = scalar_lea.sflag [#allocation3], 1
    %628 = vsyncpa %s627, 1

</llo_original>
